<compile_context>
chip_gen: v5e
topology: v5e:2x2
jax: 0.10.0
libtpu: 0.0.40
codegen_flags: <defaults>
</compile_context>

<pallas_src>
import math
from functools import partial

import jax
import jax.numpy as jnp
from jax import lax
from jax.experimental import pallas as pl
from jax.experimental.pallas import tpu as pltpu

_LANE = 128
_SUBLANE = 8


# ----------------------------------------------------------------------------
# Stage 1: per-node folded projections  el = h @ (W_l @ a),  er = h @ (W_r @ a)
# (al_row / ar_row are (1, Fin) row vectors; one cheap cross-lane sum per row
#  tile, computed exactly once per node.)
# ----------------------------------------------------------------------------
def _proj_kernel(h_ref, al_ref, ar_ref, el_ref, er_ref):
    h = h_ref[...]                                                   # (tr, Fin)
    el_ref[...] = jnp.sum(h * al_ref[...], axis=-1, keepdims=True)   # (tr, 1)
    er_ref[...] = jnp.sum(h * ar_ref[...], axis=-1, keepdims=True)   # (tr, 1)


# ----------------------------------------------------------------------------
# Stage 2: (N, N) attention tile.
#   e[i, j] = leakyrelu(el[i] + er[j]);  diagonal zeroed.
# Purely HBM-store-bound: each grid step reads tm + tn scalars, writes tm*tn.
# ----------------------------------------------------------------------------
def _attention_tile_kernel(el_ref, er_ref, out_ref, *, alpha):
    tm, tn = out_ref.shape

    s = el_ref[...] + er_ref[...]                 # (tm,1) + (1,tn) -> (tm,tn)
    if 0.0 < alpha < 1.0:
        att = jnp.maximum(s, alpha * s)           # LeakyReLU, 2 VALU ops/elem
    else:                                         # generic (non-standard alpha)
        att = jnp.where(s > 0, s, alpha * s)

    row0 = pl.program_id(0) * tm
    col0 = pl.program_id(1) * tn
    # Does this output tile intersect the main diagonal?
    intersects = jnp.logical_and(row0 < col0 + tn, col0 < row0 + tm)

    @pl.when(intersects)
    def _():
        # Small (tm,1)/(1,tn) iotas; broadcasting performs the full-tile compare.
        row = lax.broadcasted_iota(jnp.int32, (tm, 1), 0) + row0
        col = lax.broadcasted_iota(jnp.int32, (1, tn), 1) + col0
        out_ref[...] = jnp.where(row == col, 0.0, att).astype(out_ref.dtype)

    @pl.when(jnp.logical_not(intersects))
    def _():
        out_ref[...] = att.astype(out_ref.dtype)  # off-diagonal tile: no mask


# ----------------------------------------------------------------------------
# Tile-size selection (byte-budget aware; generation-safe)
# ----------------------------------------------------------------------------
def _round_down(x, m):
    return max((x // m) * m, m)


def _stage2_tiles(n, elem_bytes, target_tile_bytes):
    """Pick the (tm, tn) output tile for the (N, N) attention map."""
    if n * elem_bytes * _SUBLANE <= target_tile_bytes:
        # Full row-width tiles: every store is one contiguous tm*N*elem burst.
        tn = n
        tm = min(_round_down(target_tile_bytes // (n * elem_bytes), _SUBLANE), n)
        # Megacore (v7x): keep >= 2 row blocks so both TensorCores get work.
        if tm >= n and n >= 2 * _SUBLANE:
            tm = _round_down(pl.cdiv(n, 2), _SUBLANE)
        return tm, tn
    # Very-large-N fallback: 2-D tiling with lane-dense column blocks.
    tn = min(_round_down(target_tile_bytes // (elem_bytes * _SUBLANE), _LANE),
             _round_down(n, _LANE))
    tm = min(_round_down(target_tile_bytes // (tn * elem_bytes), _SUBLANE), n)
    return tm, tn


def _stage1_rows(n, fin, elem_bytes=4, budget_bytes=4 * 1024 * 1024):
    """Row tile for stage 1 such that the double-buffered h block <= budget."""
    per_row = max(fin * elem_bytes, 1)
    tr = _round_down(max((budget_bytes // 2) // per_row, _SUBLANE), _SUBLANE)
    return n if tr >= n else tr


# ----------------------------------------------------------------------------
# Forward wrapper
# ----------------------------------------------------------------------------
def implicit_layer_forward(h, W, a, alpha, *, out_dtype=jnp.float32,
                           target_tile_bytes=8 * 1024 * 1024):
    """h: (N, Fin) f32, W: (2*Fin, Fout) f32, a: (Fout, 1) f32 -> (N, N)."""
    N, fin = h.shape
    fout = W.shape[1]
    assert W.shape == (2 * fin, fout) and a.shape == (fout, 1)

    h = h.astype(jnp.float32)
    W = W.astype(jnp.float32)
    a = a.astype(jnp.float32)

    # Parameter-only fold (outside the hot path): al = W_l @ a, ar = W_r @ a.
    al_row = (W[:fin] @ a).reshape(1, fin)
    ar_row = (W[fin:] @ a).reshape(1, fin)

    # ---- Stage 1: el (N, 1), er (N, 1) ------------------------------------
    tr = _stage1_rows(N, fin)
    el, er_col = pl.pallas_call(
        _proj_kernel,
        out_shape=(jax.ShapeDtypeStruct((N, 1), jnp.float32),
                   jax.ShapeDtypeStruct((N, 1), jnp.float32)),
        grid=(pl.cdiv(N, tr),),
        in_specs=[pl.BlockSpec((tr, fin), lambda i: (i, 0)),
                  pl.BlockSpec((1, fin), lambda i: (0, 0)),
                  pl.BlockSpec((1, fin), lambda i: (0, 0))],
        out_specs=(pl.BlockSpec((tr, 1), lambda i: (i, 0)),
                   pl.BlockSpec((tr, 1), lambda i: (i, 0))),
        compiler_params=pltpu.CompilerParams(
            dimension_semantics=("parallel",)),
    )(h, al_row, ar_row)

    # Tiny O(N) relayout so stage 2 can broadcast er along lanes (pure glue).
    er_row = er_col.reshape(1, N)

    # ---- Stage 2: tiled (N, N) broadcast-add / LeakyReLU / diag mask ------
    elem = jnp.dtype(out_dtype).itemsize
    tm, tn = _stage2_tiles(N, elem, target_tile_bytes)
    grid = (pl.cdiv(N, tm), pl.cdiv(N, tn))

    # Double-buffered output tile (+ tiny input blocks) with 2x headroom,
    # capped comfortably under every generation's physical VMEM (v7x: 64 MiB).
    vmem_limit = int(min(max(4 * tm * tn * elem, 16 * 1024 * 1024),
                         48 * 1024 * 1024))

    out = pl.pallas_call(
        partial(_attention_tile_kernel, alpha=float(alpha)),
        out_shape=jax.ShapeDtypeStruct((N, N), out_dtype),
        grid=grid,
        in_specs=[pl.BlockSpec((tm, 1), lambda i, j: (i, 0)),
                  pl.BlockSpec((1, tn), lambda i, j: (0, j))],
        out_specs=pl.BlockSpec((tm, tn), lambda i, j: (i, j)),
        compiler_params=pltpu.CompilerParams(
            dimension_semantics=("parallel", "parallel"),
            vmem_limit_bytes=vmem_limit),
    )(el, er_row)
    return out


# ----------------------------------------------------------------------------
# Pure-JAX reference mirroring the PyTorch forward (eval mode)
# ----------------------------------------------------------------------------
def implicit_layer_reference(h, W, a, alpha):
    fin = h.shape[1]
    il = h @ W[:fin]
    ir = h @ W[fin:]
    e = (il @ a) + (ir @ a).T                      # (N, N)
    att = jnp.where(e > 0, e, alpha * e)
    N = h.shape[0]
    mask = jnp.ones((N, N), dtype=jnp.float32) - jnp.eye(N, dtype=jnp.float32)
    return mask * att


def xavier_uniform(key, shape, dtype=jnp.float32):
    fan_in, fan_out = shape[0], shape[1]
    bound = math.sqrt(6.0 / (fan_in + fan_out))
    return jax.random.uniform(key, shape, dtype=dtype, minval=-bound, maxval=bound)


if __name__ == "__main__":
    alpha = 0.2
    dropout = 0.5  # identity at inference

    key = jax.random.PRNGKey(0)
    k_w, k_a, k1, k2, k3 = jax.random.split(key, 5)

    in_features, out_features = 16, 32
    W = xavier_uniform(k_w, (2 * in_features, out_features))
    a = xavier_uniform(k_a, (out_features, 1))

    # (name, N): single tile, unaligned N (partial blocks), multi-row-block.
    tests = (("single-tile", 8, k1),
             ("unaligned", 300, k2),
             ("multi-row-block", 512, k3))

    for name, n, kk in tests:
        h = jax.random.normal(kk, (n, in_features), dtype=jnp.float32)
        out = jax.block_until_ready(implicit_layer_forward(h, W, a, alpha))
        ref = implicit_layer_reference(h, W, a, alpha)
        assert out.shape == (n, n)
        assert jnp.allclose(out, ref, atol=1e-4, rtol=1e-4), \
            f"mismatch vs reference ({name})"

    print("KERNEL_OK")
</pallas_src>

<mosaic_0001>
module attributes {stable_mosaic.version = 11 : i64} {
  func.func @_proj_kernel(%arg0: i32, %arg1: memref<8x16xf32, #tpu.memory_space<vmem>>, %arg2: memref<1x16xf32, #tpu.memory_space<vmem>>, %arg3: memref<1x16xf32, #tpu.memory_space<vmem>>, %arg4: memref<8x1xf32, #tpu.memory_space<vmem>>, %arg5: memref<8x1xf32, #tpu.memory_space<vmem>>) attributes {dimension_semantics = [#tpu.dimension_semantics<parallel>], iteration_bounds = array<i64: 1>, scalar_prefetch = 0 : i64, scratch_operands = 0 : i64, tpu.core_type = #tpu.core_type<tc>, window_params = [{transform_indices = @transform_0, window_bounds = array<i64: 8, 16>}, {pipeline_mode = #tpu.pipeline_mode<synchronous>, transform_indices = @transform_1, window_bounds = array<i64: 1, 16>}, {pipeline_mode = #tpu.pipeline_mode<synchronous>, transform_indices = @transform_2, window_bounds = array<i64: 1, 16>}, {transform_indices = @transform_3, window_bounds = array<i64: 8, 1>}, {transform_indices = @transform_4, window_bounds = array<i64: 8, 1>}]} {
    %c0 = arith.constant 0 : index
    %c0_0 = arith.constant 0 : index
    %0 = vector.load %arg1[%c0, %c0_0] : memref<8x16xf32, #tpu.memory_space<vmem>>, vector<8x16xf32>
    %c0_1 = arith.constant 0 : index
    %c0_2 = arith.constant 0 : index
    %1 = vector.load %arg2[%c0_1, %c0_2] : memref<1x16xf32, #tpu.memory_space<vmem>>, vector<1x16xf32>
    %2 = vector.broadcast %1 : vector<1x16xf32> to vector<8x16xf32>
    %3 = arith.mulf %0, %2 : vector<8x16xf32>
    %cst = arith.constant dense<0.000000e+00> : vector<8xf32>
    %4 = vector.multi_reduction <add>, %3, %cst [1] : vector<8x16xf32> to vector<8xf32>
    %5 = vector.shape_cast %4 : vector<8xf32> to vector<8x1xf32>
    %c0_3 = arith.constant 0 : index
    %c0_4 = arith.constant 0 : index
    %6 = vector.load %arg4[%c0_3, %c0_4] : memref<8x1xf32, #tpu.memory_space<vmem>>, vector<8x1xf32>
    tpu.vector_store %arg4[%c0_3, %c0_4], %5 {strides = array<i32>} : memref<8x1xf32, #tpu.memory_space<vmem>>, vector<8x1xf32>,
    %c0_5 = arith.constant 0 : index
    %c0_6 = arith.constant 0 : index
    %7 = vector.load %arg3[%c0_5, %c0_6] : memref<1x16xf32, #tpu.memory_space<vmem>>, vector<1x16xf32>
    %8 = vector.broadcast %7 : vector<1x16xf32> to vector<8x16xf32>
    %9 = arith.mulf %0, %8 : vector<8x16xf32>
    %cst_7 = arith.constant dense<0.000000e+00> : vector<8xf32>
    %10 = vector.multi_reduction <add>, %9, %cst_7 [1] : vector<8x16xf32> to vector<8xf32>
    %11 = vector.shape_cast %10 : vector<8xf32> to vector<8x1xf32>
    %c0_8 = arith.constant 0 : index
    %c0_9 = arith.constant 0 : index
    %12 = vector.load %arg5[%c0_8, %c0_9] : memref<8x1xf32, #tpu.memory_space<vmem>>, vector<8x1xf32>
    tpu.vector_store %arg5[%c0_8, %c0_9], %11 {strides = array<i32>} : memref<8x1xf32, #tpu.memory_space<vmem>>, vector<8x1xf32>,
    return
  }
  func.func @transform_0(%arg0: i32) -> (i32, i32) {
    %c0_i32 = arith.constant 0 : i32
    %c0_i32_0 = arith.constant 0 : i32
    return %arg0, %c0_i32 : i32, i32
  }
  func.func @transform_1(%arg0: i32) -> (i32, i32) {
    %c0_i32 = arith.constant 0 : i32
    %c0_i32_0 = arith.constant 0 : i32
    %c0_i32_1 = arith.constant 0 : i32
    return %c0_i32, %c0_i32_0 : i32, i32
  }
  func.func @transform_2(%arg0: i32) -> (i32, i32) {
    %c0_i32 = arith.constant 0 : i32
    %c0_i32_0 = arith.constant 0 : i32
    %c0_i32_1 = arith.constant 0 : i32
    return %c0_i32, %c0_i32_0 : i32, i32
  }
  func.func @transform_3(%arg0: i32) -> (i32, i32) {
    %c0_i32 = arith.constant 0 : i32
    %c0_i32_0 = arith.constant 0 : i32
    return %arg0, %c0_i32 : i32, i32
  }
  func.func @transform_4(%arg0: i32) -> (i32, i32) {
    %c0_i32 = arith.constant 0 : i32
    %c0_i32_0 = arith.constant 0 : i32
    return %arg0, %c0_i32 : i32, i32
  }
}

</mosaic_0001>

<llo_original>
// kernel: tpu_custom_call.1
$region0: #{tpu_custom_call.1}
  #allocation0 [shape = 'u32[]', space=smem, size = 0x4, offset = 0x4, fixed_abs, tag = 'smem constant byte address 0x4 - core index']
  #allocation1 [shape = 'u32[72,128]{1,0:T(1,128)}', space=vmem, size = 0x9000, scoped, tag = 'internal scratch']
  %s0 = inlined_call_operand.hbm [shape: f32[8,16], index: 0, kind: input, shape index: {}]
  %s1 = inlined_call_operand.hbm [shape: f32[1,16], index: 1, kind: input, shape index: {}]
  %s2 = inlined_call_operand.vmem [shape: f32[1,16], index: 2, kind: input, shape index: {}]
  %s3 = inlined_call_operand.vmem [shape: f32[8,1], index: 3, kind: output, shape index: {0}]
  %s4 = inlined_call_operand.vmem [shape: f32[8,1], index: 4, kind: output, shape index: {1}]
  %5 = xla_tuple %s3, %s4
  %s6 = sld [smem:[#allocation0]]
  $region38: #{tpu_custom_call.1} parent=0
    _
  %s8 = ssub.s32 1, %s6
  %s9 = scalar_select 0, %s8, %s6
  $region1: #{tpu_custom_call.1} parent=0
    #allocation2 [shape = 'u8[4096]{0}', space=vmem, size = 0x1000, scoped, tag = 'input window, operand 0, single buffered']
    #allocation3 [shape = 's32[1]{0}', space=sflag, size = 0x4, scoped, tag = 'scoped memory for tpu_custom_call.1']
    #allocation4 [shape = 'u8[512]{0}', space=vmem, size = 0x400, scoped, tag = 'input window, operand 1, single buffered']
    #allocation5 [shape = 's32[1]{0}', space=sflag, size = 0x4, scoped, tag = 'scoped memory for tpu_custom_call.1']
    %10 = vsyncpa [#allocation3], 0
    %11 = vsyncpa [#allocation5], 0
    // Predicated region
    $region2: #{tpu_custom_call.1} parent=1 // pred_check
      _
    $region3: #{tpu_custom_call.1} parent=1 // pred_check_branch
      %13 = sbr.rel (0) target = $region5
    $region4: #{tpu_custom_call.1} parent=1 // pred_region
      %15 = vsyncadd [#allocation3], 0
      %s17 = sshll.u32 %s0, 4
      %s18 = int_to_ptr.hbm [resolvable:$true] %s17
      %s19 = sshll.u32 [#allocation2], 4
      %s20 = int_to_ptr.vmem [resolvable:$true] %s19
      %22 = dma.hbm_to_vmem [thread:$0]  %s18, 128, %s20, [#allocation3]
    $region5: #{tpu_custom_call.1} parent=1 // pred_fallthru
      _
    // Predicated region
    $region6: #{tpu_custom_call.1} parent=1 // pred_check
      _
    $region7: #{tpu_custom_call.1} parent=1 // pred_check_branch
      %24 = sbr.rel (0) target = $region9
    $region8: #{tpu_custom_call.1} parent=1 // pred_region
      %26 = vsyncadd [#allocation5], 0
      %s28 = sshll.u32 %s1, 4
      %s29 = int_to_ptr.hbm [resolvable:$true] %s28
      %s30 = sshll.u32 [#allocation4], 4
      %s31 = int_to_ptr.vmem [resolvable:$true] %s30
      %33 = dma.hbm_to_vmem [thread:$0]  %s29, 16, %s31, [#allocation5]
    $region9: #{tpu_custom_call.1} parent=1 // pred_fallthru
      _
    // Predicated region
    $region10: #{tpu_custom_call.1} parent=1 // pred_check
      _
    $region11: #{tpu_custom_call.1} parent=1 // pred_check_branch
      %35 = sbr.rel (0) target = $region13
    $region12: #{tpu_custom_call.1} parent=1 // pred_region
      _
    $region13: #{tpu_custom_call.1} parent=1 // pred_fallthru
      _
    // Predicated region
    $region14: #{tpu_custom_call.1} parent=1 // pred_check
      _
    $region15: #{tpu_custom_call.1} parent=1 // pred_check_branch
      %37 = sbr.rel (0) target = $region17
    $region16: #{tpu_custom_call.1} parent=1 // pred_region
      %39 = dma.done [#allocation3], 128
    $region17: #{tpu_custom_call.1} parent=1 // pred_fallthru
      _
    // Predicated region
    $region18: #{tpu_custom_call.1} parent=1 // pred_check
      _
    $region19: #{tpu_custom_call.1} parent=1 // pred_check_branch
      %41 = sbr.rel (0) target = $region21
    $region20: #{tpu_custom_call.1} parent=1 // pred_region
      %43 = dma.done [#allocation5], 16
    $region21: #{tpu_custom_call.1} parent=1 // pred_fallthru
      _
    %v44 = vld [vmem:[#allocation2] sm:$0xff]
    %v45 = vld [vmem:[#allocation4] sm:$0x1]
    %v47 = vperm.slane %v45, 0
    %v49 = vmul.f32 %v44, %v47
    %vm50 = vcmask 130048
    %v51 = vsel %vm50, %v49, 0.0
    %52 = vadd.xlane.f32.xlu0 %v51
    %v53 = vpop.xlane.xlu0 %52
    %vm54 = vcmask 7168
    %55 = vst.msk [vmem:[%s3] sm:$0xff] %vm54, %v53
    %v56 = vld [vmem:[%s2] sm:$0x1]
    %v58 = vperm.slane %v56, 0
    %v60 = vmul.f32 %v44, %v58
    %v61 = vsel %vm50, %v60, 0.0
    %62 = vadd.xlane.f32.xlu0 %v61
    %v63 = vpop.xlane.xlu0 %62
    %64 = vst.msk [vmem:[%s4] sm:$0xff] %vm54, %v63
    // Predicated region
    $region22: #{tpu_custom_call.1} parent=1 // pred_check
      _
    $region23: #{tpu_custom_call.1} parent=1 // pred_check_branch
      %66 = sbr.rel (0) target = $region25
    $region24: #{tpu_custom_call.1} parent=1 // pred_region
      _
    $region25: #{tpu_custom_call.1} parent=1 // pred_fallthru
      _
    // Predicated region
    $region26: #{tpu_custom_call.1} parent=1 // pred_check
      _
    $region27: #{tpu_custom_call.1} parent=1 // pred_check_branch
      %68 = sbr.rel (0) target = $region29
    $region28: #{tpu_custom_call.1} parent=1 // pred_region
      _
    $region29: #{tpu_custom_call.1} parent=1 // pred_fallthru
      _
    // Predicated region
    $region30: #{tpu_custom_call.1} parent=1 // pred_check
      _
    $region31: #{tpu_custom_call.1} parent=1 // pred_check_branch
      %70 = sbr.rel (0) target = $region33
    $region32: #{tpu_custom_call.1} parent=1 // pred_region
      _
    $region33: #{tpu_custom_call.1} parent=1 // pred_fallthru
      _
    // Predicated region
    $region34: #{tpu_custom_call.1} parent=1 // pred_check
      _
    $region35: #{tpu_custom_call.1} parent=1 // pred_check_branch
      %72 = sbr.rel (0) target = $region37
    $region36: #{tpu_custom_call.1} parent=1 // pred_region
      _
    $region37: #{tpu_custom_call.1} parent=1 // pred_fallthru
      _
    %73 = vsyncpa [#allocation3], 1
    %74 = vsyncpa [#allocation5], 1

</llo_original>
